<compile_context>
chip_gen: v7x
topology: tpu7x:2x2x1
jax: 0.10.0
libtpu: 0.0.40
codegen_flags: <defaults>
</compile_context>

<pallas_src>
import functools

import jax
import jax.numpy as jnp
from jax import lax
from jax.experimental import pallas as pl
from jax.experimental.pallas import tpu as pltpu

LEAK = 0.2
BN_EPS = 1e-5


def _leaky(x):
    return jnp.where(x >= 0, x, LEAK * x)


def _round_up(v, m):
    return (v + m - 1) // m * m


# ---------------------------------------------------------------------------
# Pass 1: conv1 -> lrelu -> conv2, accumulate per-channel sum / sumsq of h2.
# ---------------------------------------------------------------------------
def _stats_kernel(x_ref, w1_ref, b1_ref, w2_ref, sum_ref, ssq_ref,
                  sum_scr, ssq_scr, *, tile_p, hw, n_tiles, need_mask):
    """x:(C,TP) f32 tile of one image | w1:(ndf,C) bf16 | b1:(ndf,1) f32
    w2:(2ndf,ndf) bf16 | sum_ref/ssq_ref:(2ndf,1) f32 outputs (written once in
    the epilogue) | sum_scr/ssq_scr:(2ndf,128) f32 persistent VMEM scratch."""
    n = pl.program_id(0)
    t = pl.program_id(1)

    @pl.when(jnp.logical_and(n == 0, t == 0))
    def _init():
        sum_scr[...] = jnp.zeros_like(sum_scr)
        ssq_scr[...] = jnp.zeros_like(ssq_scr)

    x = x_ref[...].astype(jnp.bfloat16)                              # (C, TP)
    h1 = jnp.dot(w1_ref[...], x, preferred_element_type=jnp.float32)
    h1 = _leaky(h1 + b1_ref[...])                                    # (ndf, TP) f32
    h2 = jnp.dot(w2_ref[...], h1.astype(jnp.bfloat16),
                 preferred_element_type=jnp.float32)                 # (2ndf, TP) f32

    nblk = tile_p // 128

    def accumulate(h2v):
        # VALU-only: accumulate 128-lane blocks in registers, one scratch RMW
        # per step; the cross-lane (XLU) reduce is deferred to the epilogue.
        s = h2v[:, 0:128]
        q = s * s
        for j in range(1, nblk):
            blk = h2v[:, j * 128:(j + 1) * 128]
            s = s + blk
            q = q + blk * blk
        sum_scr[...] += s
        ssq_scr[...] += q

    if need_mask:
        # Only the last tile of each image carries padded columns; mask there
        # only (single where, square reuses the masked value -> NaN-safe).
        tail = hw - (n_tiles - 1) * tile_p   # static

        @pl.when(t != n_tiles - 1)
        def _full():
            accumulate(h2)

        @pl.when(t == n_tiles - 1)
        def _masked():
            col = lax.broadcasted_iota(jnp.int32, (1, tile_p), 1)
            accumulate(jnp.where(col < tail, h2, 0.0))
    else:
        accumulate(h2)

    @pl.when(jnp.logical_and(n == pl.num_programs(0) - 1,
                             t == pl.num_programs(1) - 1))
    def _epilogue():
        sum_ref[...] = jnp.sum(sum_scr[...], axis=1, keepdims=True)
        ssq_ref[...] = jnp.sum(ssq_scr[...], axis=1, keepdims=True)


# ---------------------------------------------------------------------------
# Pass 2: recompute h1, conv2 with BN-scale folded into w2, + b_aff -> lrelu
# -> conv3 (single output channel) as per-channel scale + sublane reduction.
# ---------------------------------------------------------------------------
def _apply_kernel(x_ref, w1_ref, b1_ref, w2a_ref, b_ref, w3_ref, o_ref):
    """w2a: (2ndf,ndf) bf16 = a_aff*w2 | b: (2ndf,1) folded BN shift
    w3: (2ndf,1) conv3 weight | o: (1,TP) f32 lane-dense row."""
    x = x_ref[...].astype(jnp.bfloat16)
    h1 = jnp.dot(w1_ref[...], x, preferred_element_type=jnp.float32)
    h1 = _leaky(h1 + b1_ref[...])
    h2 = jnp.dot(w2a_ref[...], h1.astype(jnp.bfloat16),
                 preferred_element_type=jnp.float32)      # already BN-scaled
    h2n = _leaky(h2 + b_ref[...])
    # conv3 has one output channel: per-channel scale + sublane reduction
    # (VPU/XLU) instead of a width-1 MXU matmul.
    o_ref[...] = jnp.sum(h2n * w3_ref[...], axis=0,
                         keepdims=True).astype(o_ref.dtype)


def init_params(key, input_nc, ndf):
    """Deterministic synthetic parameters (PyTorch-like uniform fan-in init)."""
    k1, k2, k3, k4 = jax.random.split(key, 4)

    def u(k, shape, fan_in):
        bound = 1.0 / jnp.sqrt(float(fan_in))
        return jax.random.uniform(k, shape, jnp.float32, -bound, bound)

    w1 = u(k1, (ndf, input_nc), input_nc)        # Conv2d(input_nc, ndf, 1)
    b1 = u(k2, (ndf,), input_nc)
    w2 = u(k3, (2 * ndf, ndf), ndf)              # Conv2d(ndf, 2*ndf, 1), bias=False
    w3 = u(k4, (1, 2 * ndf), 2 * ndf)            # Conv2d(2*ndf, 1, 1), bias=False
    gamma = jnp.ones((2 * ndf,), jnp.float32)    # BatchNorm2d default affine init
    beta = jnp.zeros((2 * ndf,), jnp.float32)
    return dict(w1=w1, b1=b1, w2=w2, w3=w3, gamma=gamma, beta=beta)


def pixel_discriminator(x_nchw, params, *, tile_p=8192,
                        vmem_limit_bytes=48 * 1024 * 1024):
    """Full forward.  x_nchw: (N, C, H, W) f32 -> (N, 1, H, W) f32.

    tile_p: pixels per grid step (clamped to round_up(H*W, 128)).  8192 keeps
    the per-tile working set well under v7x's 64 MiB VMEM with the 48 MiB
    scoped limit; on v5e/v6e tile_p=16384-32768 with vmem_limit_bytes up to
    64-96 MiB pushes closer to the HBM roofline.
    """
    N, C, H, W = x_nchw.shape
    ndf = params["w1"].shape[0]
    c2 = 2 * ndf
    HW = H * W
    P = N * HW

    tp = min(tile_p, _round_up(HW, 128))
    n_tiles = (HW + tp - 1) // tp
    need_mask = (n_tiles * tp != HW)

    # Free view: NCHW -> (N, C, H*W).  No transpose / pad / cast pass over x;
    # the bf16 cast happens in-kernel.
    x3 = x_nchw.reshape(N, C, HW)

    w1 = params["w1"].astype(jnp.bfloat16)                   # (ndf, Cin)
    b1 = params["b1"].reshape(ndf, 1).astype(jnp.float32)
    w2 = params["w2"].astype(jnp.bfloat16)                   # (2ndf, ndf)
    w3 = params["w3"].reshape(c2, 1).astype(jnp.float32)     # (2ndf, 1)
    gamma = params["gamma"].reshape(c2, 1).astype(jnp.float32)
    beta = params["beta"].reshape(c2, 1).astype(jnp.float32)

    x_spec = pl.BlockSpec((pl.Squeezed(), C, tp), lambda n, i: (n, 0, i))
    rep = lambda n, i: (0, 0)       # weights / accumulators stay VMEM-resident
    vmem_cap = dict(vmem_limit_bytes=vmem_limit_bytes)

    # --- pass 1: global per-channel sum / sum-of-squares of h2 --------------
    h2_sum, h2_ssq = pl.pallas_call(
        functools.partial(_stats_kernel, tile_p=tp, hw=HW, n_tiles=n_tiles,
                          need_mask=need_mask),
        out_shape=(jax.ShapeDtypeStruct((c2, 1), jnp.float32),
                   jax.ShapeDtypeStruct((c2, 1), jnp.float32)),
        grid=(N, n_tiles),
        in_specs=[
            x_spec,
            pl.BlockSpec((ndf, C), rep),
            pl.BlockSpec((ndf, 1), rep),
            pl.BlockSpec((c2, ndf), rep),
        ],
        out_specs=(pl.BlockSpec((c2, 1), rep),
                   pl.BlockSpec((c2, 1), rep)),
        scratch_shapes=[pltpu.VMEM((c2, 128), jnp.float32),
                        pltpu.VMEM((c2, 128), jnp.float32)],
        compiler_params=pltpu.CompilerParams(
            dimension_semantics=("arbitrary", "arbitrary"), **vmem_cap),
    )(x3, w1, b1, w2)

    # Fold BatchNorm (training mode, biased variance) into one affine per chan,
    # then fold the scale straight into the conv2 weights for pass 2.
    inv_p = jnp.float32(1.0 / P)
    mean = h2_sum * inv_p
    var = jnp.maximum(h2_ssq * inv_p - mean * mean, 0.0)
    a_aff = gamma * lax.rsqrt(var + BN_EPS)
    b_aff = beta - mean * a_aff
    w2_aff = (a_aff * params["w2"].astype(jnp.float32)).astype(jnp.bfloat16)

    # --- pass 2: conv1 -> lrelu -> scaled conv2 (+b_aff) -> lrelu -> conv3 ---
    out3 = pl.pallas_call(
        _apply_kernel,
        out_shape=jax.ShapeDtypeStruct((N, 1, HW), jnp.float32),
        grid=(N, n_tiles),
        in_specs=[
            x_spec,
            pl.BlockSpec((ndf, C), rep),
            pl.BlockSpec((ndf, 1), rep),
            pl.BlockSpec((c2, ndf), rep),
            pl.BlockSpec((c2, 1), rep),
            pl.BlockSpec((c2, 1), rep),
        ],
        out_specs=pl.BlockSpec((pl.Squeezed(), 1, tp),
                               lambda n, i: (n, 0, i)),     # lane-dense row
        compiler_params=pltpu.CompilerParams(
            dimension_semantics=("parallel", "parallel"), **vmem_cap),
    )(x3, w1, b1, w2_aff, b_aff, w3)

    return out3.reshape(N, 1, H, W)


def _reference(x_nchw, params):
    """Pure-JAX f32 reference of the same forward (correctness self-check)."""
    N, C, H, W = x_nchw.shape
    x = jnp.transpose(x_nchw, (0, 2, 3, 1)).reshape(-1, C)
    h1 = _leaky(x @ params["w1"].T + params["b1"])
    h2 = h1 @ params["w2"].T
    mean = jnp.mean(h2, axis=0, keepdims=True)
    var = jnp.mean((h2 - mean) ** 2, axis=0, keepdims=True)
    h2n = _leaky((h2 - mean) / jnp.sqrt(var + BN_EPS) * params["gamma"]
                 + params["beta"])
    out = h2n @ params["w3"].T
    return jnp.transpose(out.reshape(N, H, W, 1), (0, 3, 1, 2))


if __name__ == "__main__":
    key = jax.random.PRNGKey(0)
    kx, kp = jax.random.split(key)

    N, input_nc, H, W = 2, 4, 16, 16
    ndf = 64

    x = jax.random.normal(kx, (N, input_nc, H, W), jnp.float32)
    params = init_params(kp, input_nc, ndf)

    out = jax.block_until_ready(pixel_discriminator(x, params))
    assert out.shape == (N, 1, H, W), out.shape

    ref = jax.block_until_ready(_reference(x, params))
    # Kernel feeds bf16 operands to the MXU (f32 accumulation) and folds the
    # BN scale into bf16 conv2 weights; allow the corresponding few-per-mille
    # deviation vs the all-f32 reference.
    max_err = float(jnp.max(jnp.abs(out - ref)))
    assert jnp.allclose(out, ref, atol=5e-2, rtol=5e-2), max_err

    print("KERNEL_OK")
</pallas_src>

<mosaic_0001>
module attributes {stable_mosaic.version = 11 : i64} {
  func.func @_stats_kernel(%arg0: i32, %arg1: i32, %arg2: memref<1x4x256xf32, #tpu.memory_space<vmem>>, %arg3: memref<64x4xbf16, #tpu.memory_space<vmem>>, %arg4: memref<64x1xf32, #tpu.memory_space<vmem>>, %arg5: memref<128x64xbf16, #tpu.memory_space<vmem>>, %arg6: memref<128x1xf32, #tpu.memory_space<vmem>>, %arg7: memref<128x1xf32, #tpu.memory_space<vmem>>, %arg8: memref<128x128xf32, #tpu.memory_space<vmem>>, %arg9: memref<128x128xf32, #tpu.memory_space<vmem>>) attributes {dimension_semantics = [#tpu.dimension_semantics<arbitrary>, #tpu.dimension_semantics<arbitrary>], iteration_bounds = array<i64: 2, 1>, scalar_prefetch = 0 : i64, scratch_operands = 2 : i64, tpu.core_type = #tpu.core_type<tc>, window_params = [{transform_indices = @transform_0, window_bounds = array<i64: 1, 4, 256>}, {pipeline_mode = #tpu.pipeline_mode<synchronous>, transform_indices = @transform_1, window_bounds = array<i64: 64, 4>}, {pipeline_mode = #tpu.pipeline_mode<synchronous>, transform_indices = @transform_2, window_bounds = array<i64: 64, 1>}, {pipeline_mode = #tpu.pipeline_mode<synchronous>, transform_indices = @transform_3, window_bounds = array<i64: 128, 64>}, {pipeline_mode = #tpu.pipeline_mode<synchronous>, transform_indices = @transform_4, window_bounds = array<i64: 128, 1>}, {pipeline_mode = #tpu.pipeline_mode<synchronous>, transform_indices = @transform_5, window_bounds = array<i64: 128, 1>}]} {
    %c0_i32 = arith.constant 0 : i32
    %0 = arith.cmpi eq, %arg0, %c0_i32 : i32
    %c0_i32_0 = arith.constant 0 : i32
    %1 = arith.cmpi eq, %arg1, %c0_i32_0 : i32
    %2 = arith.andi %0, %1 : i1
    %3 = arith.extui %2 : i1 to i32
    %c0_i32_1 = arith.constant 0 : i32
    %4 = arith.cmpi ne, %3, %c0_i32_1 : i32
    scf.if %4 {
      %cst_23 = arith.constant 0.000000e+00 : f32
      %38 = vector.broadcast %cst_23 : f32 to vector<128x128xf32>
      %c0_24 = arith.constant 0 : index
      %c0_25 = arith.constant 0 : index
      %39 = vector.load %arg8[%c0_24, %c0_25] : memref<128x128xf32, #tpu.memory_space<vmem>>, vector<128x128xf32>
      tpu.vector_store %arg8[%c0_24, %c0_25], %38 {strides = array<i32>} : memref<128x128xf32, #tpu.memory_space<vmem>>, vector<128x128xf32>,
      %cst_26 = arith.constant 0.000000e+00 : f32
      %40 = vector.broadcast %cst_26 : f32 to vector<128x128xf32>
      %c0_27 = arith.constant 0 : index
      %c0_28 = arith.constant 0 : index
      %41 = vector.load %arg9[%c0_27, %c0_28] : memref<128x128xf32, #tpu.memory_space<vmem>>, vector<128x128xf32>
      tpu.vector_store %arg9[%c0_27, %c0_28], %40 {strides = array<i32>} : memref<128x128xf32, #tpu.memory_space<vmem>>, vector<128x128xf32>,
    } else {
    }
    %c0 = arith.constant 0 : index
    %c0_2 = arith.constant 0 : index
    %c0_3 = arith.constant 0 : index
    %5 = vector.load %arg2[%c0, %c0_2, %c0_3] : memref<1x4x256xf32, #tpu.memory_space<vmem>>, vector<1x4x256xf32>
    %6 = vector.shape_cast %5 : vector<1x4x256xf32> to vector<4x256xf32>
    %7 = arith.truncf %6 : vector<4x256xf32> to vector<4x256xbf16>
    %c0_4 = arith.constant 0 : index
    %c0_5 = arith.constant 0 : index
    %8 = vector.load %arg3[%c0_4, %c0_5] : memref<64x4xbf16, #tpu.memory_space<vmem>>, vector<64x4xbf16>
    %cst = arith.constant dense<0.000000e+00> : vector<64x256xf32>
    %9 = tpu.matmul %8, %7, %cst {dimension_numbers = #tpu.dot_dimension_numbers<[1], [0], [0], [1], [0, 0, 1, 1], [], []>} : vector<64x4xbf16>, vector<4x256xbf16>, vector<64x256xf32> -> vector<64x256xf32>
    %c0_6 = arith.constant 0 : index
    %c0_7 = arith.constant 0 : index
    %10 = vector.load %arg4[%c0_6, %c0_7] : memref<64x1xf32, #tpu.memory_space<vmem>>, vector<64x1xf32>
    %11 = vector.broadcast %10 : vector<64x1xf32> to vector<64x256xf32>
    %12 = arith.addf %9, %11 : vector<64x256xf32>
    %cst_8 = arith.constant 0.000000e+00 : f32
    %13 = vector.broadcast %cst_8 : f32 to vector<64x256xf32>
    %14 = arith.cmpf oge, %12, %13 : vector<64x256xf32>
    %cst_9 = arith.constant 2.000000e-01 : f32
    %15 = vector.broadcast %cst_9 : f32 to vector<64x256xf32>
    %16 = arith.mulf %15, %12 : vector<64x256xf32>
    %17 = arith.select %14, %12, %16 : vector<64x256xi1>, vector<64x256xf32>
    %c0_10 = arith.constant 0 : index
    %c0_11 = arith.constant 0 : index
    %18 = vector.load %arg5[%c0_10, %c0_11] : memref<128x64xbf16, #tpu.memory_space<vmem>>, vector<128x64xbf16>
    %19 = arith.truncf %17 : vector<64x256xf32> to vector<64x256xbf16>
    %cst_12 = arith.constant dense<0.000000e+00> : vector<128x256xf32>
    %20 = tpu.matmul %18, %19, %cst_12 {dimension_numbers = #tpu.dot_dimension_numbers<[1], [0], [0], [1], [0, 0, 1, 1], [], []>} : vector<128x64xbf16>, vector<64x256xbf16>, vector<128x256xf32> -> vector<128x256xf32>
    %21 = vector.extract_strided_slice %20 {offsets = [0, 0], sizes = [128, 128], strides = [1, 1]} : vector<128x256xf32> to vector<128x128xf32>
    %22 = arith.mulf %21, %21 : vector<128x128xf32>
    %23 = vector.extract_strided_slice %20 {offsets = [0, 128], sizes = [128, 128], strides = [1, 1]} : vector<128x256xf32> to vector<128x128xf32>
    %24 = arith.addf %21, %23 : vector<128x128xf32>
    %25 = arith.mulf %23, %23 : vector<128x128xf32>
    %26 = arith.addf %22, %25 : vector<128x128xf32>
    %c0_13 = arith.constant 0 : index
    %c0_14 = arith.constant 0 : index
    %27 = vector.load %arg8[%c0_13, %c0_14] : memref<128x128xf32, #tpu.memory_space<vmem>>, vector<128x128xf32>
    %28 = arith.addf %27, %24 : vector<128x128xf32>
    %c0_15 = arith.constant 0 : index
    %c0_16 = arith.constant 0 : index
    %29 = vector.load %arg8[%c0_15, %c0_16] : memref<128x128xf32, #tpu.memory_space<vmem>>, vector<128x128xf32>
    tpu.vector_store %arg8[%c0_15, %c0_16], %28 {strides = array<i32>} : memref<128x128xf32, #tpu.memory_space<vmem>>, vector<128x128xf32>,
    %c0_17 = arith.constant 0 : index
    %c0_18 = arith.constant 0 : index
    %30 = vector.load %arg9[%c0_17, %c0_18] : memref<128x128xf32, #tpu.memory_space<vmem>>, vector<128x128xf32>
    %31 = arith.addf %30, %26 : vector<128x128xf32>
    %c0_19 = arith.constant 0 : index
    %c0_20 = arith.constant 0 : index
    %32 = vector.load %arg9[%c0_19, %c0_20] : memref<128x128xf32, #tpu.memory_space<vmem>>, vector<128x128xf32>
    tpu.vector_store %arg9[%c0_19, %c0_20], %31 {strides = array<i32>} : memref<128x128xf32, #tpu.memory_space<vmem>>, vector<128x128xf32>,
    %c1_i32 = arith.constant 1 : i32
    %33 = arith.cmpi eq, %arg0, %c1_i32 : i32
    %c0_i32_21 = arith.constant 0 : i32
    %34 = arith.cmpi eq, %arg1, %c0_i32_21 : i32
    %35 = arith.andi %33, %34 : i1
    %36 = arith.extui %35 : i1 to i32
    %c0_i32_22 = arith.constant 0 : i32
    %37 = arith.cmpi ne, %36, %c0_i32_22 : i32
    scf.if %37 {
      %c0_23 = arith.constant 0 : index
      %c0_24 = arith.constant 0 : index
      %38 = vector.load %arg8[%c0_23, %c0_24] : memref<128x128xf32, #tpu.memory_space<vmem>>, vector<128x128xf32>
      %cst_25 = arith.constant dense<0.000000e+00> : vector<128xf32>
      %39 = vector.multi_reduction <add>, %38, %cst_25 [1] : vector<128x128xf32> to vector<128xf32>
      %40 = vector.shape_cast %39 : vector<128xf32> to vector<128x1xf32>
      %c0_26 = arith.constant 0 : index
      %c0_27 = arith.constant 0 : index
      %41 = vector.load %arg6[%c0_26, %c0_27] : memref<128x1xf32, #tpu.memory_space<vmem>>, vector<128x1xf32>
      tpu.vector_store %arg6[%c0_26, %c0_27], %40 {strides = array<i32>} : memref<128x1xf32, #tpu.memory_space<vmem>>, vector<128x1xf32>,
      %c0_28 = arith.constant 0 : index
      %c0_29 = arith.constant 0 : index
      %42 = vector.load %arg9[%c0_28, %c0_29] : memref<128x128xf32, #tpu.memory_space<vmem>>, vector<128x128xf32>
      %cst_30 = arith.constant dense<0.000000e+00> : vector<128xf32>
      %43 = vector.multi_reduction <add>, %42, %cst_30 [1] : vector<128x128xf32> to vector<128xf32>
      %44 = vector.shape_cast %43 : vector<128xf32> to vector<128x1xf32>
      %c0_31 = arith.constant 0 : index
      %c0_32 = arith.constant 0 : index
      %45 = vector.load %arg7[%c0_31, %c0_32] : memref<128x1xf32, #tpu.memory_space<vmem>>, vector<128x1xf32>
      tpu.vector_store %arg7[%c0_31, %c0_32], %44 {strides = array<i32>} : memref<128x1xf32, #tpu.memory_space<vmem>>, vector<128x1xf32>,
    } else {
    }
    return
  }
  func.func @transform_0(%arg0: i32, %arg1: i32) -> (i32, i32, i32) {
    %c0_i32 = arith.constant 0 : i32
    %c0_i32_0 = arith.constant 0 : i32
    return %arg0, %c0_i32, %arg1 : i32, i32, i32
  }
  func.func @transform_1(%arg0: i32, %arg1: i32) -> (i32, i32) {
    %c0_i32 = arith.constant 0 : i32
    %c0_i32_0 = arith.constant 0 : i32
    %c0_i32_1 = arith.constant 0 : i32
    return %c0_i32, %c0_i32_0 : i32, i32
  }
  func.func @transform_2(%arg0: i32, %arg1: i32) -> (i32, i32) {
    %c0_i32 = arith.constant 0 : i32
    %c0_i32_0 = arith.constant 0 : i32
    %c0_i32_1 = arith.constant 0 : i32
    return %c0_i32, %c0_i32_0 : i32, i32
  }
  func.func @transform_3(%arg0: i32, %arg1: i32) -> (i32, i32) {
    %c0_i32 = arith.constant 0 : i32
    %c0_i32_0 = arith.constant 0 : i32
    %c0_i32_1 = arith.constant 0 : i32
    return %c0_i32, %c0_i32_0 : i32, i32
  }
  func.func @transform_4(%arg0: i32, %arg1: i32) -> (i32, i32) {
    %c0_i32 = arith.constant 0 : i32
    %c0_i32_0 = arith.constant 0 : i32
    %c0_i32_1 = arith.constant 0 : i32
    return %c0_i32, %c0_i32_0 : i32, i32
  }
  func.func @transform_5(%arg0: i32, %arg1: i32) -> (i32, i32) {
    %c0_i32 = arith.constant 0 : i32
    %c0_i32_0 = arith.constant 0 : i32
    %c0_i32_1 = arith.constant 0 : i32
    return %c0_i32, %c0_i32_0 : i32, i32
  }
}

</mosaic_0001>

<llo_original>
// kernel: tpu_custom_call.1
$region0: #{tpu_custom_call.1}
  #allocation0 [shape = 'u32[]', space=smem, size = 0x4, offset = 0x4, fixed_abs, tag = 'smem constant byte address 0x4 - core index']
  #allocation1 [shape = 'u32[144,128]{1,0:T(1,128)}', space=vmem, size = 0x12000, scoped, tag = 'internal scratch']
  #allocation2 [shape = 'f32[128,128]{1,0:T(8,128)}', space=vmem, size = 0x10000, scoped, tag = 'scratch operand']
  #allocation3 [shape = 'f32[128,128]{1,0:T(8,128)}', space=vmem, size = 0x10000, scoped, tag = 'scratch operand']
  %s0 = inlined_call_operand.vmem [shape: f32[2,4,256], index: 0, kind: input, shape index: {}]
  %s1 = inlined_call_operand.vmem [shape: bf16[64,4], index: 1, kind: input, shape index: {}]
  %s2 = inlined_call_operand.vmem [shape: f32[64,1], index: 2, kind: input, shape index: {}]
  %s3 = inlined_call_operand.vmem [shape: bf16[128,64], index: 3, kind: input, shape index: {}]
  %s4 = inlined_call_operand.vmem [shape: f32[128,1], index: 4, kind: output, shape index: {0}]
  %s5 = inlined_call_operand.vmem [shape: f32[128,1], index: 5, kind: output, shape index: {1}]
  %6 = xla_tuple %s4, %s5
  %s7 = sld [smem:[#allocation0]]
  $region65: #{tpu_custom_call.1} parent=0
    _
  %s9 = ssub.s32 1, %s7
  %s10 = scalar_select 0, %s9, %s7
  loop: start=0, step=1, limit=4
  $region2: #{tpu_custom_call.1} parent=0 // loop_pre_header
    _
  $region3: #{tpu_custom_call.1} parent=0 // loop_header
    %s12 = sphi 0, %s16
    %p13 = scmp.ge.s32.totalorder %s12, 4
    %s19 = sphi 0, %s31
    %s20 = sphi 0, %s27
    %s21 = sphi 0, %s19
    %s22 = sphi 0, %s20
    %s23 = sphi 0, %s21
    %s24 = sphi 0, %s22
    %s36 = sphi 0, %s38
    %s39 = sphi 0, %s36
    %s40 = sphi 0, %s39
    %s56 = sphi 0, %s40
    %s60 = sphi 0, %s60
    %s62 = sphi 0, %s60
    %s63 = sphi 0, %s62
    %s77 = sphi 0, %s63
    %s81 = sphi 0, %s81
    %s83 = sphi 0, %s81
    %s84 = sphi 0, %s83
    %s98 = sphi 0, %s84
    %s102 = sphi 0, %s102
    %s104 = sphi 0, %s102
    %s105 = sphi 0, %s104
    %s119 = sphi 0, %s105
    %s123 = sphi 0, %s123
    %s125 = sphi 0, %s123
    %s126 = sphi 0, %s125
    %s140 = sphi 0, %s126
    %s144 = sphi 0, %s144
    %s146 = sphi 0, %s144
    %s147 = sphi 0, %s146
    %s161 = sphi 0, %s147
  $region4: #{tpu_custom_call.1} parent=0 // loop_header_branch
    %15 = sbr.rel (%p13) target = $region8
  $region5: #{tpu_custom_call.1} parent=0 // loop_body
    %s17 = ssub.s32 %s12, 1
    %s18 = ssub.s32 %s12, 2
    %s25 = sadd.s32 1, %s20
    %p26 = scmp.ge.s32.totalorder %s25, 1
    %s27 = scalar_select %p26, 0, %s25
    %s28 = sadd.s32 1, %s19
    %s29 = scalar_select %p26, %s28, %s19
    %p30 = scmp.ge.s32.totalorder %s29, 2
    %s31 = scalar_select %p30, 0, %s29
    %s32 = ssub.s32 %s19, %s31
    %s33 = ssub.s32 %s20, %s27
    %s34 = sor.u32 %s32, %s33
    %p35 = scmp.eq.s32.totalorder %s34, 0
    %s37 = sadd.s32 %s36, 1
    %s38 = scalar_select %p35, %s36, %s37
    %p41 = pneg %p35
    %p42 = scmp.eq.s32.totalorder %s12, 1
    %p43 = por %p41, %p42
    %p44 = scmp.ne.s32.totalorder %s36, %s39
    %p45 = scmp.eq.s32.totalorder %s12, 0
    %p46 = por %p44, %p45
    %p47 = scmp.ne.s32.totalorder %s36, %s39
    %p48 = scmp.eq.s32.totalorder %s17, 1
    %p49 = por %p47, %p48
    %p50 = scmp.ne.s32.totalorder %s39, %s40
    %p51 = scmp.eq.s32.totalorder %s17, 0
    %p52 = por %p50, %p51
    %p53 = scmp.ne.s32.totalorder %s39, %s40
    %p54 = scmp.eq.s32.totalorder %s18, 1
    %p55 = por %p53, %p54
    %p57 = scmp.ne.s32.totalorder %s40, %s56
    %p58 = scmp.eq.s32.totalorder %s18, 0
    %p59 = por %p57, %p58
    %s61 = sadd.s32 %s60, 1
    %p64 = scmp.eq.s32.totalorder %s12, 1
    %p65 = scmp.ne.s32.totalorder %s60, %s62
    %p66 = scmp.eq.s32.totalorder %s12, 0
    %p67 = por %p65, %p66
    %p68 = scmp.ne.s32.totalorder %s60, %s62
    %p69 = scmp.eq.s32.totalorder %s17, 1
    %p70 = por %p68, %p69
    %p71 = scmp.ne.s32.totalorder %s62, %s63
    %p72 = scmp.eq.s32.totalorder %s17, 0
    %p73 = por %p71, %p72
    %p74 = scmp.ne.s32.totalorder %s62, %s63
    %p75 = scmp.eq.s32.totalorder %s18, 1
    %p76 = por %p74, %p75
    %p78 = scmp.ne.s32.totalorder %s63, %s77
    %p79 = scmp.eq.s32.totalorder %s18, 0
    %p80 = por %p78, %p79
    %s82 = sadd.s32 %s81, 1
    %p85 = scmp.eq.s32.totalorder %s12, 1
    %p86 = scmp.ne.s32.totalorder %s81, %s83
    %p87 = scmp.eq.s32.totalorder %s12, 0
    %p88 = por %p86, %p87
    %p89 = scmp.ne.s32.totalorder %s81, %s83
    %p90 = scmp.eq.s32.totalorder %s17, 1
    %p91 = por %p89, %p90
    %p92 = scmp.ne.s32.totalorder %s83, %s84
    %p93 = scmp.eq.s32.totalorder %s17, 0
    %p94 = por %p92, %p93
    %p95 = scmp.ne.s32.totalorder %s83, %s84
    %p96 = scmp.eq.s32.totalorder %s18, 1
    %p97 = por %p95, %p96
    %p99 = scmp.ne.s32.totalorder %s84, %s98
    %p100 = scmp.eq.s32.totalorder %s18, 0
    %p101 = por %p99, %p100
    %s103 = sadd.s32 %s102, 1
    %p106 = scmp.eq.s32.totalorder %s12, 1
    %p107 = scmp.ne.s32.totalorder %s102, %s104
    %p108 = scmp.eq.s32.totalorder %s12, 0
    %p109 = por %p107, %p108
    %p110 = scmp.ne.s32.totalorder %s102, %s104
    %p111 = scmp.eq.s32.totalorder %s17, 1
    %p112 = por %p110, %p111
    %p113 = scmp.ne.s32.totalorder %s104, %s105
    %p114 = scmp.eq.s32.totalorder %s17, 0
    %p115 = por %p113, %p114
    %p116 = scmp.ne.s32.totalorder %s104, %s105
    %p117 = scmp.eq.s32.totalorder %s18, 1
    %p118 = por %p116, %p117
    %p120 = scmp.ne.s32.totalorder %s105, %s119
    %p121 = scmp.eq.s32.totalorder %s18, 0
    %p122 = por %p120, %p121
    %s124 = sadd.s32 %s123, 1
    %p127 = scmp.eq.s32.totalorder %s12, 1
    %p128 = scmp.ne.s32.totalorder %s123, %s125
    %p129 = scmp.eq.s32.totalorder %s12, 0
    %p130 = por %p128, %p129
    %p131 = scmp.ne.s32.totalorder %s123, %s125
    %p132 = scmp.eq.s32.totalorder %s17, 1
    %p133 = por %p131, %p132
    %p134 = scmp.ne.s32.totalorder %s125, %s126
    %p135 = scmp.eq.s32.totalorder %s17, 0
    %p136 = por %p134, %p135
    %p137 = scmp.ne.s32.totalorder %s125, %s126
    %p138 = scmp.eq.s32.totalorder %s18, 1
    %p139 = por %p137, %p138
    %p141 = scmp.ne.s32.totalorder %s126, %s140
    %p142 = scmp.eq.s32.totalorder %s18, 0
    %p143 = por %p141, %p142
    %s145 = sadd.s32 %s144, 1
    %p148 = scmp.eq.s32.totalorder %s12, 1
    %p149 = scmp.ne.s32.totalorder %s144, %s146
    %p150 = scmp.eq.s32.totalorder %s12, 0
    %p151 = por %p149, %p150
    %p152 = scmp.ne.s32.totalorder %s144, %s146
    %p153 = scmp.eq.s32.totalorder %s17, 1
    %p154 = por %p152, %p153
    %p155 = scmp.ne.s32.totalorder %s146, %s147
    %p156 = scmp.eq.s32.totalorder %s17, 0
    %p157 = por %p155, %p156
    %p158 = scmp.ne.s32.totalorder %s146, %s147
    %p159 = scmp.eq.s32.totalorder %s18, 1
    %p160 = por %p158, %p159
    %p162 = scmp.ne.s32.totalorder %s147, %s161
    %p163 = scmp.eq.s32.totalorder %s18, 0
    %p164 = por %p162, %p163
    %p165 = scmp.le.s32.totalorder 1, %s12
    %p166 = scmp.lt.s32.totalorder %s12, 3
    %p167 = pnand %p165, %p166
    %p168 = pneg %p167
    // Predicated region
    $region9: #{tpu_custom_call.1} parent=5 // pred_check
      _
    $region10: #{tpu_custom_call.1} parent=5 // pred_check_branch
      %170 = sbr.rel (%p167) target = $region12
    $region11: #{tpu_custom_call.1} parent=5 // pred_region
      %s171 = ssub.s32 %s12, 1
      // Predicated region
      $region13: #{tpu_custom_call.1} parent=11 // pred_check
        %p172 = pneg %p73
      $region14: #{tpu_custom_call.1} parent=11 // pred_check_branch
        %174 = sbr.rel (%p172) target = $region16
      $region15: #{tpu_custom_call.1} parent=11 // pred_region
        _
      $region16: #{tpu_custom_call.1} parent=11 // pred_fallthru
        _
      // Predicated region
      $region17: #{tpu_custom_call.1} parent=11 // pred_check
        %p175 = pneg %p94
      $region18: #{tpu_custom_call.1} parent=11 // pred_check_branch
        %177 = sbr.rel (%p175) target = $region20
      $region19: #{tpu_custom_call.1} parent=11 // pred_region
        _
      $region20: #{tpu_custom_call.1} parent=11 // pred_fallthru
        _
      // Predicated region
      $region21: #{tpu_custom_call.1} parent=11 // pred_check
        %p178 = pneg %p115
      $region22: #{tpu_custom_call.1} parent=11 // pred_check_branch
        %180 = sbr.rel (%p178) target = $region24
      $region23: #{tpu_custom_call.1} parent=11 // pred_region
        _
      $region24: #{tpu_custom_call.1} parent=11 // pred_fallthru
        _
    $region12: #{tpu_custom_call.1} parent=5 // pred_fallthru
      _
    %p181 = scmp.lt.s32.totalorder %s12, 2
    // Predicated region
    $region25: #{tpu_custom_call.1} parent=5 // pred_check
      %p182 = pneg %p181
    $region26: #{tpu_custom_call.1} parent=5 // pred_check_branch
      %184 = sbr.rel (%p182) target = $region28
    $region27: #{tpu_custom_call.1} parent=5 // pred_region
      // Predicated region
      $region29: #{tpu_custom_call.1} parent=27 // pred_check
        %p185 = pneg %p46
      $region30: #{tpu_custom_call.1} parent=27 // pred_check_branch
        %187 = sbr.rel (%p185) target = $region32
      $region31: #{tpu_custom_call.1} parent=27 // pred_region
        %s188 = smul.u32 2, %s20
        %p189 = scmp.lt.s32.totalorder %s19, 1
        %s190 = scalar_select %p189, %s19, 1
        %p191 = scmp.lt.s32.totalorder %s188, 1
        %s192 = scalar_select %p191, %s188, 1
        %s193 = smul.addr %s190, 2
        %s194 = sadd.s32 %s192, %s193
        %s195 = smul.addr %s194, 4
        %s196 = scalar_lea.vmem %s0, %s195
        %s197 = smul.u32 2, %s20
      $region32: #{tpu_custom_call.1} parent=27 // pred_fallthru
        _
    $region28: #{tpu_custom_call.1} parent=5 // pred_fallthru
      _
    %p198 = scmp.le.s32.totalorder 1, %s12
    %p199 = scmp.lt.s32.totalorder %s12, 3
    %p200 = pnand %p198, %p199
    %p201 = pneg %p200
    // Predicated region
    $region33: #{tpu_custom_call.1} parent=5 // pred_check
      _
    $region34: #{tpu_custom_call.1} parent=5 // pred_check_branch
      %203 = sbr.rel (%p200) target = $region36
    $region35: #{tpu_custom_call.1} parent=5 // pred_region
      %s204 = ssub.s32 %s12, 1
      %s205 = smul.u32 2, %s22
      %p206 = scmp.lt.s32.totalorder %s21, 1
      %s207 = scalar_select %p206, %s21, 1
      %p208 = scmp.lt.s32.totalorder %s205, 1
      %s209 = scalar_select %p208, %s205, 1
      %s210 = smul.addr %s207, 2
      %s211 = sadd.s32 %s209, %s210
      %s212 = smul.addr %s211, 4
      %s213 = scalar_lea.vmem %s0, %s212
      %p214 = pneg %p52
      %p215 = pneg %p49
      %p216 = pneg %p73
      %p217 = pneg %p70
      %p218 = pneg %p94
      %p219 = pneg %p91
      %p220 = pneg %p115
      %p221 = pneg %p112
      %p222 = pneg %p136
      %p223 = pneg %p133
      %p224 = pneg %p157
      %p225 = pneg %p154
      %s226 = smul.u32 2, %s22
      %p227 = scmp.lt.s32.totalorder %s21, 1
      %s228 = scalar_select %p227, %s21, 1
      %p229 = scmp.lt.s32.totalorder %s226, 1
      %s230 = scalar_select %p229, %s226, 1
      %s231 = smul.addr %s228, 2
      %s232 = sadd.s32 %s230, %s231
      %s233 = smul.addr %s232, 4
      %s234 = scalar_lea.vmem %s0, %s233
      %s235 = smul.u32 2, %s22
      %p237 = scmp.eq.s32.totalorder %s21, 0
      %p238 = scmp.eq.s32.totalorder %s22, 0
      %p239 = pnand %p237, %p238
      %p240 = pneg %p239
      // Predicated region
      $region37: #{tpu_custom_call.1} parent=35 // pred_check
        _
      $region38: #{tpu_custom_call.1} parent=35 // pred_check_branch
        %242 = sbr.rel (%p239) target = $region40
      $region39: #{tpu_custom_call.1} parent=35 // pred_region
        %243 = vst [vmem:[#allocation2] sm:$0xff] 0.0
        %244 = vst [vmem:[#allocation2 + $0x8] sm:$0xff] 0.0
        %245 = vst [vmem:[#allocation2 + $0x10] sm:$0xff] 0.0
        %246 = vst [vmem:[#allocation2 + $0x18] sm:$0xff] 0.0
        %247 = vst [vmem:[#allocation2 + $0x20] sm:$0xff] 0.0
        %248 = vst [vmem:[#allocation2 + $0x28] sm:$0xff] 0.0
        %249 = vst [vmem:[#allocation2 + $0x30] sm:$0xff] 0.0
        %250 = vst [vmem:[#allocation2 + $0x38] sm:$0xff] 0.0
        %251 = vst [vmem:[#allocation2 + $0x40] sm:$0xff] 0.0
        %252 = vst [vmem:[#allocation2 + $0x48] sm:$0xff] 0.0
        %253 = vst [vmem:[#allocation2 + $0x50] sm:$0xff] 0.0
        %254 = vst [vmem:[#allocation2 + $0x58] sm:$0xff] 0.0
        %255 = vst [vmem:[#allocation2 + $0x60] sm:$0xff] 0.0
        %256 = vst [vmem:[#allocation2 + $0x68] sm:$0xff] 0.0
        %257 = vst [vmem:[#allocation2 + $0x70] sm:$0xff] 0.0
        %258 = vst [vmem:[#allocation2 + $0x78] sm:$0xff] 0.0
        %259 = vst [vmem:[#allocation3] sm:$0xff] 0.0
        %260 = vst [vmem:[#allocation3 + $0x8] sm:$0xff] 0.0
        %261 = vst [vmem:[#allocation3 + $0x10] sm:$0xff] 0.0
        %262 = vst [vmem:[#allocation3 + $0x18] sm:$0xff] 0.0
        %263 = vst [vmem:[#allocation3 + $0x20] sm:$0xff] 0.0
        %264 = vst [vmem:[#allocation3 + $0x28] sm:$0xff] 0.0
        %265 = vst [vmem:[#allocation3 + $0x30] sm:$0xff] 0.0
        %266 = vst [vmem:[#allocation3 + $0x38] sm:$0xff] 0.0
        %267 = vst [vmem:[#allocation3 + $0x40] sm:$0xff] 0.0
        %268 = vst [vmem:[#allocation3 + $0x48] sm:$0xff] 0.0
        %269 = vst [vmem:[#allocation3 + $0x50] sm:$0xff] 0.0
        %270 = vst [vmem:[#allocation3 + $0x58] sm:$0xff] 0.0
        %271 = vst [vmem:[#allocation3 + $0x60] sm:$0xff] 0.0
        %272 = vst [vmem:[#allocation3 + $0x68] sm:$0xff] 0.0
        %273 = vst [vmem:[#allocation3 + $0x70] sm:$0xff] 0.0
        %274 = vst [vmem:[#allocation3 + $0x78] sm:$0xff] 0.0
      $region40: #{tpu_custom_call.1} parent=35 // pred_fallthru
        _
      %v275 = vld [vmem:[%s234] sm:$0xff]
      %v277 = vcombine.high %v275, %v275
      %v279 = vpack.c.bf16 %v275, %v275
      %v280 = vpack.c.bf16 %v277, %v277
      %v281 = vld [vmem:[%s1] sm:$0xf]
      %v282 = vld [vmem:[%s1 + $0x4] sm:$0xf]
      %v283 = vld [vmem:[%s1 + $0x8] sm:$0xf]
      %v284 = vld [vmem:[%s1 + $0xc] sm:$0xf]
      %v285 = vld [vmem:[%s1 + $0x10] sm:$0xf]
      %v286 = vld [vmem:[%s1 + $0x14] sm:$0xf]
      %v287 = vld [vmem:[%s1 + $0x18] sm:$0xf]
      %v288 = vld [vmem:[%s1 + $0x1c] sm:$0xf]
      %v289 = vld [vmem:[%s2] sm:$0xff]
      %v290 = vld [vmem:[%s2 + $0x8] sm:$0xff]
      %v291 = vld [vmem:[%s2 + $0x10] sm:$0xff]
      %v292 = vld [vmem:[%s2 + $0x18] sm:$0xff]
      %v293 = vld [vmem:[%s2 + $0x20] sm:$0xff]
      %v294 = vld [vmem:[%s2 + $0x28] sm:$0xff]
      %v295 = vld [vmem:[%s2 + $0x30] sm:$0xff]
      %v296 = vld [vmem:[%s2 + $0x38] sm:$0xff]
      %298 = vset.pattern.permute.xlu0 0
      %299 = vperm.xlu0 %298, %v289
      %v300 = vpop.permute.xlu0 %299
      %303 = vset.pattern.permute.xlu0 0
      %304 = vperm.xlu0 %303, %v290
      %v305 = vpop.permute.xlu0 %304
      %308 = vset.pattern.permute.xlu0 0
      %309 = vperm.xlu0 %308, %v291
      %v310 = vpop.permute.xlu0 %309
      %313 = vset.pattern.permute.xlu0 0
      %314 = vperm.xlu0 %313, %v292
      %v315 = vpop.permute.xlu0 %314
      %318 = vset.pattern.permute.xlu0 0
      %319 = vperm.xlu0 %318, %v293
      %v320 = vpop.permute.xlu0 %319
      %323 = vset.pattern.permute.xlu0 0
      %324 = vperm.xlu0 %323, %v294
      %v325 = vpop.permute.xlu0 %324
      %328 = vset.pattern.permute.xlu0 0
      %329 = vperm.xlu0 %328, %v295
      %v330 = vpop.permute.xlu0 %329
      %333 = vset.pattern.permute.xlu0 0
      %334 = vperm.xlu0 %333, %v296
      %v335 = vpop.permute.xlu0 %334
      %v345 = vunpack.c.l.b16 %v281
      %v346 = vunpack.c.l.b16 %v282
      %v347 = vunpack.c.l.b16 %v283
      %v348 = vunpack.c.l.b16 %v284
      %v349 = vunpack.c.l.b16 %v285
      %v350 = vunpack.c.l.b16 %v286
      %v351 = vunpack.c.l.b16 %v287
      %v352 = vunpack.c.l.b16 %v288
      %v353 = vpack.c.b16 %v346, %v345
      %v354 = vpack.c.b16 %v348, %v347
      %v355 = vpack.c.b16 %v350, %v349
      %v356 = vpack.c.b16 %v352, %v351
      %vm357 = vcmask 31744
      %v359 = vsel %vm357, %v353, 0
      %v362 = vsel %vm357, %v354, 0
      %v365 = vsel %vm357, %v355, 0
      %v368 = vsel %vm357, %v356, 0
      %vm370 = vcmask 1041408
      %v372 = vsel %vm370, %v279, 0
      %v375 = vsel %vm370, %v280, 0
      %377 = vmatprep.subr.bf16.mxu0 %v375
      %378 = vmatpush1.bf16.msra.mxu0 %v372
      %379 = vmatprep.subr.bf16.mxu0 0
      %380 = vmatpush1.bf16.msra.mxu0 0
      %381 = vmatprep.subr.bf16.mxu0 0
      %382 = vmatpush1.bf16.msra.mxu0 0
      %383 = vmatprep.subr.bf16.mxu0 0
      %384 = vmatpush1.bf16.msra.mxu0 0
      %385 = vmatprep.subr.bf16.mxu0 0
      %386 = vmatpush1.bf16.msra.mxu0 0
      %387 = vmatprep.subr.bf16.mxu0 0
      %388 = vmatpush1.bf16.msra.mxu0 0
      %389 = vmatprep.subr.bf16.mxu0 0
      %390 = vmatpush1.bf16.msra.mxu0 0
      %391 = vmatprep.subr.bf16.mxu0 0
      %392 = vmatpush1.bf16.msra.mxu0 0
      %393 = vmatprep.subr.bf16.mxu0 0
      %394 = vmatpush1.bf16.msra.mxu0 0
      %395 = vmatprep.subr.bf16.mxu0 0
      %396 = vmatpush1.bf16.msra.mxu0 0
      %397 = vmatprep.subr.bf16.mxu0 0
      %398 = vmatpush1.bf16.msra.mxu0 0
      %399 = vmatprep.subr.bf16.mxu0 0
      %400 = vmatpush1.bf16.msra.mxu0 0
      %401 = vmatprep.subr.bf16.mxu0 0
      %402 = vmatpush1.bf16.msra.mxu0 0
      %403 = vmatprep.subr.bf16.mxu0 0
      %404 = vmatpush1.bf16.msra.mxu0 0
      %405 = vmatprep.subr.bf16.mxu0 0
      %406 = vmatpush1.bf16.msra.mxu0 0
      %407 = vmatprep.subr.bf16.mxu0 0
      %408 = vmatpush1.bf16.msra.mxu0 0
      %409 = vmatprep.mubr.bf16.mxu0 0
      %410 = vmatmul.mubr.bf16.gmra.mrb[0].mxu0 %v359
      %v411 = vpop.f32.mrb[0].mxu0
      %v412 = vadd.f32 %v300, %v411
      %v413 = vpop.f32.mrb[0].mxu0
      %v414 = vadd.f32 %v300, %v413
      %v415 = vpop.f32.mrb[0].mxu0
      %v416 = vadd.f32 %v305, %v415
      %v417 = vpop.f32.mrb[0].mxu0
      %v418 = vadd.f32 %v305, %v417
      %419 = vmatprep.mubr.bf16.mxu0 0
      %420 = vmatmul.mubr.bf16.gmra.mrb[0].mxu0 %v362
      %v421 = vpop.f32.mrb[0].mxu0
      %v422 = vadd.f32 %v310, %v421
      %v423 = vpop.f32.mrb[0].mxu0
      %v424 = vadd.f32 %v310, %v423
      %v425 = vpop.f32.mrb[0].mxu0
      %v426 = vadd.f32 %v315, %v425
      %v427 = vpop.f32.mrb[0].mxu0
      %v428 = vadd.f32 %v315, %v427
      %429 = vmatprep.mubr.bf16.mxu0 0
      %430 = vmatmul.mubr.bf16.gmra.mrb[0].mxu0 %v365
      %v431 = vpop.f32.mrb[0].mxu0
      %v432 = vadd.f32 %v320, %v431
      %v433 = vpop.f32.mrb[0].mxu0
      %v434 = vadd.f32 %v320, %v433
      %v435 = vpop.f32.mrb[0].mxu0
      %v436 = vadd.f32 %v325, %v435
      %v437 = vpop.f32.mrb[0].mxu0
      %v438 = vadd.f32 %v325, %v437
      %439 = vmatprep.mubr.bf16.mxu0 0
      %440 = vmatmul.mubr.bf16.gmra.mrb[0].mxu0 %v368
      %v441 = vpop.f32.mrb[0].mxu0
      %v442 = vadd.f32 %v330, %v441
      %v443 = vpop.f32.mrb[0].mxu0
      %v444 = vadd.f32 %v330, %v443
      %v445 = vpop.f32.mrb[0].mxu0
      %v446 = vadd.f32 %v335, %v445
      %v447 = vpop.f32.mrb[0].mxu0
      %v448 = vadd.f32 %v335, %v447
      %449 = vdwg.mxu0
      %vm450 = vcmp.ge.f32.partialorder %v412, 0.0
      %vm451 = vcmp.ge.f32.partialorder %v414, 0.0
      %vm452 = vcmp.ge.f32.partialorder %v416, 0.0
      %vm453 = vcmp.ge.f32.partialorder %v418, 0.0
      %vm454 = vcmp.ge.f32.partialorder %v422, 0.0
      %vm455 = vcmp.ge.f32.partialorder %v424, 0.0
      %vm456 = vcmp.ge.f32.partialorder %v426, 0.0
      %vm457 = vcmp.ge.f32.partialorder %v428, 0.0
      %vm458 = vcmp.ge.f32.partialorder %v432, 0.0
      %vm459 = vcmp.ge.f32.partialorder %v434, 0.0
      %vm460 = vcmp.ge.f32.partialorder %v436, 0.0
      %vm461 = vcmp.ge.f32.partialorder %v438, 0.0
      %vm462 = vcmp.ge.f32.partialorder %v442, 0.0
      %vm463 = vcmp.ge.f32.partialorder %v444, 0.0
      %vm464 = vcmp.ge.f32.partialorder %v446, 0.0
      %vm465 = vcmp.ge.f32.partialorder %v448, 0.0
      %v466 = vmul.f32 %v412, 0.2
      %v467 = vmul.f32 %v414, 0.2
      %v468 = vmul.f32 %v416, 0.2
      %v469 = vmul.f32 %v418, 0.2
      %v470 = vmul.f32 %v422, 0.2
      %v471 = vmul.f32 %v424, 0.2
      %v472 = vmul.f32 %v426, 0.2
      %v473 = vmul.f32 %v428, 0.2
      %v474 = vmul.f32 %v432, 0.2
      %v475 = vmul.f32 %v434, 0.2
      %v476 = vmul.f32 %v436, 0.2
      %v477 = vmul.f32 %v438, 0.2
      %v478 = vmul.f32 %v442, 0.2
      %v479 = vmul.f32 %v444, 0.2
      %v480 = vmul.f32 %v446, 0.2
      %v481 = vmul.f32 %v448, 0.2
      %v482 = vsel %vm450, %v412, %v466
      %v483 = vsel %vm451, %v414, %v467
      %v484 = vsel %vm452, %v416, %v468
      %v485 = vsel %vm453, %v418, %v469
      %v486 = vsel %vm454, %v422, %v470
      %v487 = vsel %vm455, %v424, %v471
      %v488 = vsel %vm456, %v426, %v472
      %v489 = vsel %vm457, %v428, %v473
      %v490 = vsel %vm458, %v432, %v474
      %v491 = vsel %vm459, %v434, %v475
      %v492 = vsel %vm460, %v436, %v476
      %v493 = vsel %vm461, %v438, %v477
      %v494 = vsel %vm462, %v442, %v478
      %v495 = vsel %vm463, %v444, %v479
      %v496 = vsel %vm464, %v446, %v480
      %v497 = vsel %vm465, %v448, %v481
      %v498 = vld [vmem:[%s3] sm:$0xf]
      %v499 = vld [vmem:[%s3 + $0x4] sm:$0xf]
      %v500 = vld [vmem:[%s3 + $0x8] sm:$0xf]
      %v501 = vld [vmem:[%s3 + $0xc] sm:$0xf]
      %v502 = vld [vmem:[%s3 + $0x10] sm:$0xf]
      %v503 = vld [vmem:[%s3 + $0x14] sm:$0xf]
      %v504 = vld [vmem:[%s3 + $0x18] sm:$0xf]
      %v505 = vld [vmem:[%s3 + $0x1c] sm:$0xf]
      %v506 = vld [vmem:[%s3 + $0x20] sm:$0xf]
      %v507 = vld [vmem:[%s3 + $0x24] sm:$0xf]
      %v508 = vld [vmem:[%s3 + $0x28] sm:$0xf]
      %v509 = vld [vmem:[%s3 + $0x2c] sm:$0xf]
      %v510 = vld [vmem:[%s3 + $0x30] sm:$0xf]
      %v511 = vld [vmem:[%s3 + $0x34] sm:$0xf]
      %v512 = vld [vmem:[%s3 + $0x38] sm:$0xf]
      %v513 = vld [vmem:[%s3 + $0x3c] sm:$0xf]
      %v514 = vpack.c.bf16 %v484, %v482
      %v515 = vpack.c.bf16 %v485, %v483
      %v516 = vpack.c.bf16 %v488, %v486
      %v517 = vpack.c.bf16 %v489, %v487
      %v518 = vpack.c.bf16 %v492, %v490
      %v519 = vpack.c.bf16 %v493, %v491
      %v520 = vpack.c.bf16 %v496, %v494
      %v521 = vpack.c.bf16 %v497, %v495
      %v538 = vunpack.c.l.b16 %v498
      %v539 = vunpack.c.l.b16 %v499
      %v540 = vunpack.c.l.b16 %v500
      %v541 = vunpack.c.l.b16 %v501
      %v542 = vunpack.c.l.b16 %v502
      %v543 = vunpack.c.l.b16 %v503
      %v544 = vunpack.c.l.b16 %v504
      %v545 = vunpack.c.l.b16 %v505
      %v546 = vunpack.c.l.b16 %v506
      %v547 = vunpack.c.l.b16 %v507
      %v548 = vunpack.c.l.b16 %v508
      %v549 = vunpack.c.l.b16 %v509
      %v550 = vunpack.c.l.b16 %v510
      %v551 = vunpack.c.l.b16 %v511
      %v552 = vunpack.c.l.b16 %v512
      %v553 = vunpack.c.l.b16 %v513
      %v554 = vpack.c.b16 %v539, %v538
      %v555 = vpack.c.b16 %v541, %v540
      %v556 = vpack.c.b16 %v543, %v542
      %v557 = vpack.c.b16 %v545, %v544
      %v558 = vpack.c.b16 %v547, %v546
      %v559 = vpack.c.b16 %v549, %v548
      %v560 = vpack.c.b16 %v551, %v550
      %v561 = vpack.c.b16 %v553, %v552
      %vm562 = vcmask 523264
      %v564 = vsel %vm562, %v554, 0
      %v567 = vsel %vm562, %v555, 0
      %v570 = vsel %vm562, %v556, 0
      %v573 = vsel %vm562, %v557, 0
      %v576 = vsel %vm562, %v558, 0
      %v579 = vsel %vm562, %v559, 0
      %v582 = vsel %vm562, %v560, 0
      %v585 = vsel %vm562, %v561, 0
      %587 = vmatprep.subr.bf16.mxu0 %v515
      %588 = vmatpush1.bf16.msra.mxu0 %v514
      %589 = vmatprep.subr.bf16.mxu0 %v517
      %590 = vmatpush1.bf16.msra.mxu0 %v516
      %591 = vmatprep.subr.bf16.mxu0 %v519
      %592 = vmatpush1.bf16.msra.mxu0 %v518
      %593 = vmatprep.subr.bf16.mxu0 %v521
      %594 = vmatpush1.bf16.msra.mxu0 %v520
      %595 = vmatprep.subr.bf16.mxu0 0
      %596 = vmatpush1.bf16.msra.mxu0 0
      %597 = vmatprep.subr.bf16.mxu0 0
      %598 = vmatpush1.bf16.msra.mxu0 0
      %599 = vmatprep.subr.bf16.mxu0 0
      %600 = vmatpush1.bf16.msra.mxu0 0
      %601 = vmatprep.subr.bf16.mxu0 0
      %602 = vmatpush1.bf16.msra.mxu0 0
      %603 = vmatprep.subr.bf16.mxu0 0
      %604 = vmatpush1.bf16.msra.mxu0 0
      %605 = vmatprep.subr.bf16.mxu0 0
      %606 = vmatpush1.bf16.msra.mxu0 0
      %607 = vmatprep.subr.bf16.mxu0 0
      %608 = vmatpush1.bf16.msra.mxu0 0
      %609 = vmatprep.subr.bf16.mxu0 0
      %610 = vmatpush1.bf16.msra.mxu0 0
      %611 = vmatprep.subr.bf16.mxu0 0
      %612 = vmatpush1.bf16.msra.mxu0 0
      %613 = vmatprep.subr.bf16.mxu0 0
      %614 = vmatpush1.bf16.msra.mxu0 0
      %615 = vmatprep.subr.bf16.mxu0 0
      %616 = vmatpush1.bf16.msra.mxu0 0
      %617 = vmatprep.subr.bf16.mxu0 0
      %618 = vmatpush1.bf16.msra.mxu0 0
      %619 = vmatprep.mubr.bf16.mxu0 0
      %620 = vmatmul.mubr.bf16.gmra.mrb[0].mxu0 %v564
      %v621 = vpop.f32.mrb[0].mxu0
      %v622 = vadd.f32 0.0, %v621
      %v623 = vpop.f32.mrb[0].mxu0
      %v624 = vadd.f32 0.0, %v623
      %v625 = vpop.f32.mrb[0].mxu0
      %v626 = vadd.f32 0.0, %v625
      %v627 = vpop.f32.mrb[0].mxu0
      %v628 = vadd.f32 0.0, %v627
      %629 = vmatprep.mubr.bf16.mxu0 0
      %630 = vmatmul.mubr.bf16.gmra.mrb[0].mxu0 %v567
      %v631 = vpop.f32.mrb[0].mxu0
      %v632 = vadd.f32 0.0, %v631
      %v633 = vpop.f32.mrb[0].mxu0
      %v634 = vadd.f32 0.0, %v633
      %v635 = vpop.f32.mrb[0].mxu0
      %v636 = vadd.f32 0.0, %v635
      %v637 = vpop.f32.mrb[0].mxu0
      %v638 = vadd.f32 0.0, %v637
      %639 = vmatprep.mubr.bf16.mxu0 0
      %640 = vmatmul.mubr.bf16.gmra.mrb[0].mxu0 %v570
      %v641 = vpop.f32.mrb[0].mxu0
      %v642 = vadd.f32 0.0, %v641
      %v643 = vpop.f32.mrb[0].mxu0
      %v644 = vadd.f32 0.0, %v643
      %v645 = vpop.f32.mrb[0].mxu0
      %v646 = vadd.f32 0.0, %v645
      %v647 = vpop.f32.mrb[0].mxu0
      %v648 = vadd.f32 0.0, %v647
      %649 = vmatprep.mubr.bf16.mxu0 0
      %650 = vmatmul.mubr.bf16.gmra.mrb[0].mxu0 %v573
      %v651 = vpop.f32.mrb[0].mxu0
      %v652 = vadd.f32 0.0, %v651
      %v653 = vpop.f32.mrb[0].mxu0
      %v654 = vadd.f32 0.0, %v653
      %v655 = vpop.f32.mrb[0].mxu0
      %v656 = vadd.f32 0.0, %v655
      %v657 = vpop.f32.mrb[0].mxu0
      %v658 = vadd.f32 0.0, %v657
      %659 = vmatprep.mubr.bf16.mxu0 0
      %660 = vmatmul.mubr.bf16.gmra.mrb[0].mxu0 %v576
      %v661 = vpop.f32.mrb[0].mxu0
      %v662 = vadd.f32 0.0, %v661
      %v663 = vpop.f32.mrb[0].mxu0
      %v664 = vadd.f32 0.0, %v663
      %v665 = vpop.f32.mrb[0].mxu0
      %v666 = vadd.f32 0.0, %v665
      %v667 = vpop.f32.mrb[0].mxu0
      %v668 = vadd.f32 0.0, %v667
      %669 = vmatprep.mubr.bf16.mxu0 0
      %670 = vmatmul.mubr.bf16.gmra.mrb[0].mxu0 %v579
      %v671 = vpop.f32.mrb[0].mxu0
      %v672 = vadd.f32 0.0, %v671
      %v673 = vpop.f32.mrb[0].mxu0
      %v674 = vadd.f32 0.0, %v673
      %v675 = vpop.f32.mrb[0].mxu0
      %v676 = vadd.f32 0.0, %v675
      %v677 = vpop.f32.mrb[0].mxu0
      %v678 = vadd.f32 0.0, %v677
      %679 = vmatprep.mubr.bf16.mxu0 0
      %680 = vmatmul.mubr.bf16.gmra.mrb[0].mxu0 %v582
      %v681 = vpop.f32.mrb[0].mxu0
      %v682 = vadd.f32 0.0, %v681
      %v683 = vpop.f32.mrb[0].mxu0
      %v684 = vadd.f32 0.0, %v683
      %v685 = vpop.f32.mrb[0].mxu0
      %v686 = vadd.f32 0.0, %v685
      %v687 = vpop.f32.mrb[0].mxu0
      %v688 = vadd.f32 0.0, %v687
      %689 = vmatprep.mubr.bf16.mxu0 0
      %690 = vmatmul.mubr.bf16.gmra.mrb[0].mxu0 %v585
      %v691 = vpop.f32.mrb[0].mxu0
      %v692 = vadd.f32 0.0, %v691
      %v693 = vpop.f32.mrb[0].mxu0
      %v694 = vadd.f32 0.0, %v693
      %v695 = vpop.f32.mrb[0].mxu0
      %v696 = vadd.f32 0.0, %v695
      %v697 = vpop.f32.mrb[0].mxu0
      %v698 = vadd.f32 0.0, %v697
      %699 = vdwg.mxu0
      %v700 = vmul.f32 %v622, %v622
      %v701 = vmul.f32 %v626, %v626
      %v702 = vmul.f32 %v632, %v632
      %v703 = vmul.f32 %v636, %v636
      %v704 = vmul.f32 %v642, %v642
      %v705 = vmul.f32 %v646, %v646
      %v706 = vmul.f32 %v652, %v652
      %v707 = vmul.f32 %v656, %v656
      %v708 = vmul.f32 %v662, %v662
      %v709 = vmul.f32 %v666, %v666
      %v710 = vmul.f32 %v672, %v672
      %v711 = vmul.f32 %v676, %v676
      %v712 = vmul.f32 %v682, %v682
      %v713 = vmul.f32 %v686, %v686
      %v714 = vmul.f32 %v692, %v692
      %v715 = vmul.f32 %v696, %v696
      %v716 = vadd.f32 %v622, %v624
      %v717 = vadd.f32 %v626, %v628
      %v718 = vadd.f32 %v632, %v634
      %v719 = vadd.f32 %v636, %v638
      %v720 = vadd.f32 %v642, %v644
      %v721 = vadd.f32 %v646, %v648
      %v722 = vadd.f32 %v652, %v654
      %v723 = vadd.f32 %v656, %v658
      %v724 = vadd.f32 %v662, %v664
      %v725 = vadd.f32 %v666, %v668
      %v726 = vadd.f32 %v672, %v674
      %v727 = vadd.f32 %v676, %v678
      %v728 = vadd.f32 %v682, %v684
      %v729 = vadd.f32 %v686, %v688
      %v730 = vadd.f32 %v692, %v694
      %v731 = vadd.f32 %v696, %v698
      %v732 = vmul.f32 %v624, %v624
      %v733 = vmul.f32 %v628, %v628
      %v734 = vmul.f32 %v634, %v634
      %v735 = vmul.f32 %v638, %v638
      %v736 = vmul.f32 %v644, %v644
      %v737 = vmul.f32 %v648, %v648
      %v738 = vmul.f32 %v654, %v654
      %v739 = vmul.f32 %v658, %v658
      %v740 = vmul.f32 %v664, %v664
      %v741 = vmul.f32 %v668, %v668
      %v742 = vmul.f32 %v674, %v674
      %v743 = vmul.f32 %v678, %v678
      %v744 = vmul.f32 %v684, %v684
      %v745 = vmul.f32 %v688, %v688
      %v746 = vmul.f32 %v694, %v694
      %v747 = vmul.f32 %v698, %v698
      %v748 = vadd.f32 %v700, %v732
      %v749 = vadd.f32 %v701, %v733
      %v750 = vadd.f32 %v702, %v734
      %v751 = vadd.f32 %v703, %v735
      %v752 = vadd.f32 %v704, %v736
      %v753 = vadd.f32 %v705, %v737
      %v754 = vadd.f32 %v706, %v738
      %v755 = vadd.f32 %v707, %v739
      %v756 = vadd.f32 %v708, %v740
      %v757 = vadd.f32 %v709, %v741
      %v758 = vadd.f32 %v710, %v742
      %v759 = vadd.f32 %v711, %v743
      %v760 = vadd.f32 %v712, %v744
      %v761 = vadd.f32 %v713, %v745
      %v762 = vadd.f32 %v714, %v746
      %v763 = vadd.f32 %v715, %v747
      %v764 = vld [vmem:[#allocation2] sm:$0xff]
      %v765 = vld [vmem:[#allocation2 + $0x8] sm:$0xff]
      %v766 = vld [vmem:[#allocation2 + $0x10] sm:$0xff]
      %v767 = vld [vmem:[#allocation2 + $0x18] sm:$0xff]
      %v768 = vld [vmem:[#allocation2 + $0x20] sm:$0xff]
      %v769 = vld [vmem:[#allocation2 + $0x28] sm:$0xff]
      %v770 = vld [vmem:[#allocation2 + $0x30] sm:$0xff]
      %v771 = vld [vmem:[#allocation2 + $0x38] sm:$0xff]
      %v772 = vld [vmem:[#allocation2 + $0x40] sm:$0xff]
      %v773 = vld [vmem:[#allocation2 + $0x48] sm:$0xff]
      %v774 = vld [vmem:[#allocation2 + $0x50] sm:$0xff]
      %v775 = vld [vmem:[#allocation2 + $0x58] sm:$0xff]
      %v776 = vld [vmem:[#allocation2 + $0x60] sm:$0xff]
      %v777 = vld [vmem:[#allocation2 + $0x68] sm:$0xff]
      %v778 = vld [vmem:[#allocation2 + $0x70] sm:$0xff]
      %v779 = vld [vmem:[#allocation2 + $0x78] sm:$0xff]
      %v780 = vadd.f32 %v764, %v716
      %v781 = vadd.f32 %v765, %v717
      %v782 = vadd.f32 %v766, %v718
      %v783 = vadd.f32 %v767, %v719
      %v784 = vadd.f32 %v768, %v720
      %v785 = vadd.f32 %v769, %v721
      %v786 = vadd.f32 %v770, %v722
      %v787 = vadd.f32 %v771, %v723
      %v788 = vadd.f32 %v772, %v724
      %v789 = vadd.f32 %v773, %v725
      %v790 = vadd.f32 %v774, %v726
      %v791 = vadd.f32 %v775, %v727
      %v792 = vadd.f32 %v776, %v728
      %v793 = vadd.f32 %v777, %v729
      %v794 = vadd.f32 %v778, %v730
      %v795 = vadd.f32 %v779, %v731
      %796 = vst [vmem:[#allocation2] sm:$0xff] %v780
      %797 = vst [vmem:[#allocation2 + $0x8] sm:$0xff] %v781
      %798 = vst [vmem:[#allocation2 + $0x10] sm:$0xff] %v782
      %799 = vst [vmem:[#allocation2 + $0x18] sm:$0xff] %v783
      %800 = vst [vmem:[#allocation2 + $0x20] sm:$0xff] %v784
      %801 = vst [vmem:[#allocation2 + $0x28] sm:$0xff] %v785
      %802 = vst [vmem:[#allocation2 + $0x30] sm:$0xff] %v786
      %803 = vst [vmem:[#allocation2 + $0x38] sm:$0xff] %v787
      %804 = vst [vmem:[#allocation2 + $0x40] sm:$0xff] %v788
      %805 = vst [vmem:[#allocation2 + $0x48] sm:$0xff] %v789
      %806 = vst [vmem:[#allocation2 + $0x50] sm:$0xff] %v790
      %807 = vst [vmem:[#allocation2 + $0x58] sm:$0xff] %v791
      %808 = vst [vmem:[#allocation2 + $0x60] sm:$0xff] %v792
      %809 = vst [vmem:[#allocation2 + $0x68] sm:$0xff] %v793
      %810 = vst [vmem:[#allocation2 + $0x70] sm:$0xff] %v794
      %811 = vst [vmem:[#allocation2 + $0x78] sm:$0xff] %v795
      %v812 = vld [vmem:[#allocation3] sm:$0xff]
      %v813 = vld [vmem:[#allocation3 + $0x8] sm:$0xff]
      %v814 = vld [vmem:[#allocation3 + $0x10] sm:$0xff]
      %v815 = vld [vmem:[#allocation3 + $0x18] sm:$0xff]
      %v816 = vld [vmem:[#allocation3 + $0x20] sm:$0xff]
      %v817 = vld [vmem:[#allocation3 + $0x28] sm:$0xff]
      %v818 = vld [vmem:[#allocation3 + $0x30] sm:$0xff]
      %v819 = vld [vmem:[#allocation3 + $0x38] sm:$0xff]
      %v820 = vld [vmem:[#allocation3 + $0x40] sm:$0xff]
      %v821 = vld [vmem:[#allocation3 + $0x48] sm:$0xff]
      %v822 = vld [vmem:[#allocation3 + $0x50] sm:$0xff]
      %v823 = vld [vmem:[#allocation3 + $0x58] sm:$0xff]
      %v824 = vld [vmem:[#allocation3 + $0x60] sm:$0xff]
      %v825 = vld [vmem:[#allocation3 + $0x68] sm:$0xff]
      %v826 = vld [vmem:[#allocation3 + $0x70] sm:$0xff]
      %v827 = vld [vmem:[#allocation3 + $0x78] sm:$0xff]
      %v828 = vadd.f32 %v812, %v748
      %v829 = vadd.f32 %v813, %v749
      %v830 = vadd.f32 %v814, %v750
      %v831 = vadd.f32 %v815, %v751
      %v832 = vadd.f32 %v816, %v752
      %v833 = vadd.f32 %v817, %v753
      %v834 = vadd.f32 %v818, %v754
      %v835 = vadd.f32 %v819, %v755
      %v836 = vadd.f32 %v820, %v756
      %v837 = vadd.f32 %v821, %v757
      %v838 = vadd.f32 %v822, %v758
      %v839 = vadd.f32 %v823, %v759
      %v840 = vadd.f32 %v824, %v760
      %v841 = vadd.f32 %v825, %v761
      %v842 = vadd.f32 %v826, %v762
      %v843 = vadd.f32 %v827, %v763
      %844 = vst [vmem:[#allocation3] sm:$0xff] %v828
      %845 = vst [vmem:[#allocation3 + $0x8] sm:$0xff] %v829
      %846 = vst [vmem:[#allocation3 + $0x10] sm:$0xff] %v830
      %847 = vst [vmem:[#allocation3 + $0x18] sm:$0xff] %v831
      %848 = vst [vmem:[#allocation3 + $0x20] sm:$0xff] %v832
      %849 = vst [vmem:[#allocation3 + $0x28] sm:$0xff] %v833
      %850 = vst [vmem:[#allocation3 + $0x30] sm:$0xff] %v834
      %851 = vst [vmem:[#allocation3 + $0x38] sm:$0xff] %v835
      %852 = vst [vmem:[#allocation3 + $0x40] sm:$0xff] %v836
      %853 = vst [vmem:[#allocation3 + $0x48] sm:$0xff] %v837
      %854 = vst [vmem:[#allocation3 + $0x50] sm:$0xff] %v838
      %855 = vst [vmem:[#allocation3 + $0x58] sm:$0xff] %v839
      %856 = vst [vmem:[#allocation3 + $0x60] sm:$0xff] %v840
      %857 = vst [vmem:[#allocation3 + $0x68] sm:$0xff] %v841
      %858 = vst [vmem:[#allocation3 + $0x70] sm:$0xff] %v842
      %859 = vst [vmem:[#allocation3 + $0x78] sm:$0xff] %v843
      %p860 = scmp.eq.s32.totalorder %s21, 1
      %p861 = pnand %p860, %p238
      %p862 = pneg %p861
      // Predicated region
      $region41: #{tpu_custom_call.1} parent=35 // pred_check
        _
      $region42: #{tpu_custom_call.1} parent=35 // pred_check_branch
        %864 = sbr.rel (%p861) target = $region44
      $region43: #{tpu_custom_call.1} parent=35 // pred_region
        %v865 = vld [vmem:[#allocation2] sm:$0xff]
        %v866 = vld [vmem:[#allocation2 + $0x8] sm:$0xff]
        %v867 = vld [vmem:[#allocation2 + $0x10] sm:$0xff]
        %v868 = vld [vmem:[#allocation2 + $0x18] sm:$0xff]
        %v869 = vld [vmem:[#allocation2 + $0x20] sm:$0xff]
        %v870 = vld [vmem:[#allocation2 + $0x28] sm:$0xff]
        %v871 = vld [vmem:[#allocation2 + $0x30] sm:$0xff]
        %v872 = vld [vmem:[#allocation2 + $0x38] sm:$0xff]
        %v873 = vld [vmem:[#allocation2 + $0x40] sm:$0xff]
        %v874 = vld [vmem:[#allocation2 + $0x48] sm:$0xff]
        %v875 = vld [vmem:[#allocation2 + $0x50] sm:$0xff]
        %v876 = vld [vmem:[#allocation2 + $0x58] sm:$0xff]
        %v877 = vld [vmem:[#allocation2 + $0x60] sm:$0xff]
        %v878 = vld [vmem:[#allocation2 + $0x68] sm:$0xff]
        %v879 = vld [vmem:[#allocation2 + $0x70] sm:$0xff]
        %v880 = vld [vmem:[#allocation2 + $0x78] sm:$0xff]
        %881 = vadd.xlane.f32.xlu0 %v865
        %v882 = vpop.xlane.xlu0 %881
        %883 = vadd.xlane.f32.xlu0 %v866
        %v884 = vpop.xlane.xlu0 %883
        %885 = vadd.xlane.f32.xlu0 %v867
        %v886 = vpop.xlane.xlu0 %885
        %887 = vadd.xlane.f32.xlu0 %v868
        %v888 = vpop.xlane.xlu0 %887
        %889 = vadd.xlane.f32.xlu0 %v869
        %v890 = vpop.xlane.xlu0 %889
        %891 = vadd.xlane.f32.xlu0 %v870
        %v892 = vpop.xlane.xlu0 %891
        %893 = vadd.xlane.f32.xlu0 %v871
        %v894 = vpop.xlane.xlu0 %893
        %895 = vadd.xlane.f32.xlu0 %v872
        %v896 = vpop.xlane.xlu0 %895
        %897 = vadd.xlane.f32.xlu0 %v873
        %v898 = vpop.xlane.xlu0 %897
        %899 = vadd.xlane.f32.xlu0 %v874
        %v900 = vpop.xlane.xlu0 %899
        %901 = vadd.xlane.f32.xlu0 %v875
        %v902 = vpop.xlane.xlu0 %901
        %903 = vadd.xlane.f32.xlu0 %v876
        %v904 = vpop.xlane.xlu0 %903
        %905 = vadd.xlane.f32.xlu0 %v877
        %v906 = vpop.xlane.xlu0 %905
        %907 = vadd.xlane.f32.xlu0 %v878
        %v908 = vpop.xlane.xlu0 %907
        %909 = vadd.xlane.f32.xlu0 %v879
        %v910 = vpop.xlane.xlu0 %909
        %911 = vadd.xlane.f32.xlu0 %v880
        %v912 = vpop.xlane.xlu0 %911
        %vm913 = vcmask 7168
        %914 = vst.msk [vmem:[%s4] sm:$0xff] %vm913, %v882
        %915 = vst.msk [vmem:[%s4 + $0x8] sm:$0xff] %vm913, %v884
        %916 = vst.msk [vmem:[%s4 + $0x10] sm:$0xff] %vm913, %v886
        %917 = vst.msk [vmem:[%s4 + $0x18] sm:$0xff] %vm913, %v888
        %918 = vst.msk [vmem:[%s4 + $0x20] sm:$0xff] %vm913, %v890
        %919 = vst.msk [vmem:[%s4 + $0x28] sm:$0xff] %vm913, %v892
        %920 = vst.msk [vmem:[%s4 + $0x30] sm:$0xff] %vm913, %v894
        %921 = vst.msk [vmem:[%s4 + $0x38] sm:$0xff] %vm913, %v896
        %922 = vst.msk [vmem:[%s4 + $0x40] sm:$0xff] %vm913, %v898
        %923 = vst.msk [vmem:[%s4 + $0x48] sm:$0xff] %vm913, %v900
        %924 = vst.msk [vmem:[%s4 + $0x50] sm:$0xff] %vm913, %v902
        %925 = vst.msk [vmem:[%s4 + $0x58] sm:$0xff] %vm913, %v904
        %926 = vst.msk [vmem:[%s4 + $0x60] sm:$0xff] %vm913, %v906
        %927 = vst.msk [vmem:[%s4 + $0x68] sm:$0xff] %vm913, %v908
        %928 = vst.msk [vmem:[%s4 + $0x70] sm:$0xff] %vm913, %v910
        %929 = vst.msk [vmem:[%s4 + $0x78] sm:$0xff] %vm913, %v912
        %v930 = vld [vmem:[#allocation3] sm:$0xff]
        %v931 = vld [vmem:[#allocation3 + $0x8] sm:$0xff]
        %v932 = vld [vmem:[#allocation3 + $0x10] sm:$0xff]
        %v933 = vld [vmem:[#allocation3 + $0x18] sm:$0xff]
        %v934 = vld [vmem:[#allocation3 + $0x20] sm:$0xff]
        %v935 = vld [vmem:[#allocation3 + $0x28] sm:$0xff]
        %v936 = vld [vmem:[#allocation3 + $0x30] sm:$0xff]
        %v937 = vld [vmem:[#allocation3 + $0x38] sm:$0xff]
        %v938 = vld [vmem:[#allocation3 + $0x40] sm:$0xff]
        %v939 = vld [vmem:[#allocation3 + $0x48] sm:$0xff]
        %v940 = vld [vmem:[#allocation3 + $0x50] sm:$0xff]
        %v941 = vld [vmem:[#allocation3 + $0x58] sm:$0xff]
        %v942 = vld [vmem:[#allocation3 + $0x60] sm:$0xff]
        %v943 = vld [vmem:[#allocation3 + $0x68] sm:$0xff]
        %v944 = vld [vmem:[#allocation3 + $0x70] sm:$0xff]
        %v945 = vld [vmem:[#allocation3 + $0x78] sm:$0xff]
        %946 = vadd.xlane.f32.xlu0 %v930
        %v947 = vpop.xlane.xlu0 %946
        %948 = vadd.xlane.f32.xlu0 %v931
        %v949 = vpop.xlane.xlu0 %948
        %950 = vadd.xlane.f32.xlu0 %v932
        %v951 = vpop.xlane.xlu0 %950
        %952 = vadd.xlane.f32.xlu0 %v933
        %v953 = vpop.xlane.xlu0 %952
        %954 = vadd.xlane.f32.xlu0 %v934
        %v955 = vpop.xlane.xlu0 %954
        %956 = vadd.xlane.f32.xlu0 %v935
        %v957 = vpop.xlane.xlu0 %956
        %958 = vadd.xlane.f32.xlu0 %v936
        %v959 = vpop.xlane.xlu0 %958
        %960 = vadd.xlane.f32.xlu0 %v937
        %v961 = vpop.xlane.xlu0 %960
        %962 = vadd.xlane.f32.xlu0 %v938
        %v963 = vpop.xlane.xlu0 %962
        %964 = vadd.xlane.f32.xlu0 %v939
        %v965 = vpop.xlane.xlu0 %964
        %966 = vadd.xlane.f32.xlu0 %v940
        %v967 = vpop.xlane.xlu0 %966
        %968 = vadd.xlane.f32.xlu0 %v941
        %v969 = vpop.xlane.xlu0 %968
        %970 = vadd.xlane.f32.xlu0 %v942
        %v971 = vpop.xlane.xlu0 %970
        %972 = vadd.xlane.f32.xlu0 %v943
        %v973 = vpop.xlane.xlu0 %972
        %974 = vadd.xlane.f32.xlu0 %v944
        %v975 = vpop.xlane.xlu0 %974
        %976 = vadd.xlane.f32.xlu0 %v945
        %v977 = vpop.xlane.xlu0 %976
        %978 = vst.msk [vmem:[%s5] sm:$0xff] %vm913, %v947
        %979 = vst.msk [vmem:[%s5 + $0x8] sm:$0xff] %vm913, %v949
        %980 = vst.msk [vmem:[%s5 + $0x10] sm:$0xff] %vm913, %v951
        %981 = vst.msk [vmem:[%s5 + $0x18] sm:$0xff] %vm913, %v953
        %982 = vst.msk [vmem:[%s5 + $0x20] sm:$0xff] %vm913, %v955
        %983 = vst.msk [vmem:[%s5 + $0x28] sm:$0xff] %vm913, %v957
        %984 = vst.msk [vmem:[%s5 + $0x30] sm:$0xff] %vm913, %v959
        %985 = vst.msk [vmem:[%s5 + $0x38] sm:$0xff] %vm913, %v961
        %986 = vst.msk [vmem:[%s5 + $0x40] sm:$0xff] %vm913, %v963
        %987 = vst.msk [vmem:[%s5 + $0x48] sm:$0xff] %vm913, %v965
        %988 = vst.msk [vmem:[%s5 + $0x50] sm:$0xff] %vm913, %v967
        %989 = vst.msk [vmem:[%s5 + $0x58] sm:$0xff] %vm913, %v969
        %990 = vst.msk [vmem:[%s5 + $0x60] sm:$0xff] %vm913, %v971
        %991 = vst.msk [vmem:[%s5 + $0x68] sm:$0xff] %vm913, %v973
        %992 = vst.msk [vmem:[%s5 + $0x70] sm:$0xff] %vm913, %v975
        %993 = vst.msk [vmem:[%s5 + $0x78] sm:$0xff] %vm913, %v977
      $region44: #{tpu_custom_call.1} parent=35 // pred_fallthru
        _
      // Predicated region
      $region45: #{tpu_custom_call.1} parent=35 // pred_check
        %p994 = pneg %p133
      $region46: #{tpu_custom_call.1} parent=35 // pred_check_branch
        %996 = sbr.rel (%p994) target = $region48
      $region47: #{tpu_custom_call.1} parent=35 // pred_region
        _
      $region48: #{tpu_custom_call.1} parent=35 // pred_fallthru
        _
      // Predicated region
      $region49: #{tpu_custom_call.1} parent=35 // pred_check
        %p997 = pneg %p154
      $region50: #{tpu_custom_call.1} parent=35 // pred_check_branch
        %999 = sbr.rel (%p997) target = $region52
      $region51: #{tpu_custom_call.1} parent=35 // pred_region
        _
      $region52: #{tpu_custom_call.1} parent=35 // pred_fallthru
        _
      // Predicated region
      $region53: #{tpu_custom_call.1} parent=35 // pred_check
        %p1000 = pneg %p133
      $region54: #{tpu_custom_call.1} parent=35 // pred_check_branch
        %1002 = sbr.rel (%p1000) target = $region56
      $region55: #{tpu_custom_call.1} parent=35 // pred_region
        _
      $region56: #{tpu_custom_call.1} parent=35 // pred_fallthru
        _
      // Predicated region
      $region57: #{tpu_custom_call.1} parent=35 // pred_check
        %p1003 = pneg %p154
      $region58: #{tpu_custom_call.1} parent=35 // pred_check_branch
        %1005 = sbr.rel (%p1003) target = $region60
      $region59: #{tpu_custom_call.1} parent=35 // pred_region
        _
      $region60: #{tpu_custom_call.1} parent=35 // pred_fallthru
        _
    $region36: #{tpu_custom_call.1} parent=5 // pred_fallthru
      _
    %p1006 = scmp.le.s32.totalorder 2, %s12
    // Predicated region
    $region61: #{tpu_custom_call.1} parent=5 // pred_check
      %p1007 = pneg %p1006
    $region62: #{tpu_custom_call.1} parent=5 // pred_check_branch
      %1009 = sbr.rel (%p1007) target = $region64
    $region63: #{tpu_custom_call.1} parent=5 // pred_region
      %s1010 = ssub.s32 %s12, 2
    $region64: #{tpu_custom_call.1} parent=5 // pred_fallthru
      _
  $region6: #{tpu_custom_call.1} parent=0 // loop_footer
    %s16 = sadd.s32 1, %s12
  $region7: #{tpu_custom_call.1} parent=0 // loop_footer_branch
    %11 = sbr.rel target = $region3
  $region8: #{tpu_custom_call.1} parent=0 // loop_exit
    _

</llo_original>
